<compile_context>
chip_gen: v5e
topology: v5e:2x2
jax: 0.10.0
libtpu: 0.0.40
codegen_flags: <defaults>
</compile_context>

<pallas_src>
import functools

import jax
import jax.numpy as jnp
import numpy as np
from jax import lax
from jax.experimental import pallas as pl
from jax.experimental.pallas import tpu as pltpu

H = 128          # actor / critic hidden width (fixed by the module)
LANE = 128       # lane tile
KPAD = 16        # bf16 sublane pack for the obs contraction dim
NEG_BIG = -1e30  # mask value for padded softmax lanes


def _round_up(x, m):
    return ((x + m - 1) // m) * m


def _leaky_relu(x, slope=0.01):  # PyTorch default negative_slope = 0.01
    return jnp.where(x >= 0, x, slope * x)


# --------------------------------------------------------------------------- #
# Kernel
# --------------------------------------------------------------------------- #
def _policy_kernel(obs_ref, h0_ref, lg_ref, wcat_ref, bcat_ref,
                   w1h_ref, wc2_ref, bc2_ref, out_ref, *, n_act, a_pad):
    # ---- one fused MXU pass over every obs-consuming weight (bf16 operands,
    #      f32 accumulate; bias added in f32 afterwards) ----------------------
    fused = jnp.dot(obs_ref[...].astype(jnp.bfloat16), wcat_ref[...],
                    preferred_element_type=jnp.float32) + bcat_ref[...]
    pre_h0 = fused[:, :H]                 # Linear0 pre-activation
    lg_obs = fused[:, H:H + a_pad]        # obs part of blocks[-1] (bias folded in)
    pre_hc = fused[:, H + a_pad:]         # critic hidden pre-activation

    h0_new = _leaky_relu(pre_h0)
    h_c = _leaky_relu(pre_hc)

    # ---- logits_new: "concat" as a split matmul, accumulated in one f32 tile
    logits_new = lg_obs + jnp.dot(h0_ref[...].astype(jnp.bfloat16), w1h_ref[...],
                                  preferred_element_type=jnp.float32)

    # ---- critic value: VPU multiply + XLU lane-reduce (no padded MXU pass) --
    value = jnp.sum(h_c * wc2_ref[...], axis=-1, keepdims=True) + bc2_ref[...]

    # ---- action_prob = softmax(OLD logits), masked to the n_act valid lanes,
    #      exact divide so probs sum to exactly 1 -----------------------------
    lg = lg_ref[...]
    lane = lax.broadcasted_iota(jnp.int32, lg.shape, 1)
    valid = lane < n_act
    lg = jnp.where(valid, lg, NEG_BIG)
    m = jnp.max(lg, axis=-1, keepdims=True)
    e = jnp.where(valid, jnp.exp(lg - m), 0.0)
    probs = e / jnp.sum(e, axis=-1, keepdims=True)

    # ---- single lane-dense output slab (all segment boundaries % 128 == 0) --
    out_ref[:, 0:a_pad] = probs
    out_ref[:, a_pad:a_pad + H] = jnp.broadcast_to(value, (value.shape[0], H))
    out_ref[:, a_pad + H:a_pad + 2 * H] = h0_new
    out_ref[:, a_pad + 2 * H:] = logits_new


# --------------------------------------------------------------------------- #
# Parameter packing (PyTorch (out, in) layout -> fused padded (in, out) layout)
# --------------------------------------------------------------------------- #
def pack_params(params, obs_dim, n_act):
    """Do this once and reuse every env step (weights stay packed)."""
    obs_p = _round_up(obs_dim, KPAD)       # contraction dim: sublane pad only
    a_p = _round_up(n_act, LANE)

    w0, b0 = params["w0"], params["b0"]       # (H, obs_dim), (H,)
    w1, b1 = params["w1"], params["b1"]       # (A, obs_dim+H), (A,)
    wc1, bc1 = params["wc1"], params["bc1"]   # (H, obs_dim), (H,)
    wc2, bc2 = params["wc2"], params["bc2"]   # (1, H), (1,)

    def pad2(x, r, c):
        return jnp.pad(x, ((0, r - x.shape[0]), (0, c - x.shape[1])))

    w0_t = pad2(w0.T, obs_p, H)                        # (obs_p, H)
    w1_obs = pad2(w1[:, :obs_dim].T, obs_p, a_p)       # (obs_p, a_p)
    w1_h = pad2(w1[:, obs_dim:].T, H, a_p)             # (H, a_p)
    wc1_t = pad2(wc1.T, obs_p, H)                      # (obs_p, H)

    # MXU-only operands stored bf16 (halves weight DMA, safe on v5e/v6e/v7x).
    # TODO(synk): on v7x an fp8(e4m3) variant would cut DMA further; needs an
    #             accuracy gate, so not enabled here.
    w_cat = jnp.concatenate([w0_t, w1_obs, wc1_t], axis=1).astype(jnp.bfloat16)
    b_cat = jnp.concatenate(
        [b0, jnp.pad(b1, (0, a_p - n_act)), bc1]).astype(jnp.float32)[None, :]

    wc2_row = wc2.astype(jnp.float32).reshape(1, H)    # (1, H) f32, no lane pad
    bc2_s = bc2.astype(jnp.float32).reshape(1, 1)      # scalar bias

    return {"w_cat": w_cat, "b_cat": b_cat, "w1_h": w1_h.astype(jnp.bfloat16),
            "wc2": wc2_row, "bc2": bc2_s}


# --------------------------------------------------------------------------- #
# Forward wrapper
# --------------------------------------------------------------------------- #
def make_forward(params, obs_dim, n_act):
    packed = pack_params(params, obs_dim, n_act)
    obs_p = _round_up(obs_dim, KPAD)
    a_p = _round_up(n_act, LANE)
    out_w = a_p + 2 * H + a_p

    kernel = functools.partial(_policy_kernel, n_act=n_act, a_pad=a_p)
    vmem = pl.BlockSpec(memory_space=pltpu.MemorySpace.VMEM)

    call = pl.pallas_call(
        kernel,
        out_shape=jax.ShapeDtypeStruct((1, out_w), jnp.float32),
        in_specs=[vmem] * 8,
        out_specs=vmem,
    )

    @jax.jit
    def forward(obs, h0_old, logits_old):
        # Single-row inputs; no 8-sublane broadcast materialized in the wrapper.
        obs_b = jnp.pad(obs.astype(jnp.float32), (0, obs_p - obs_dim))[None, :]
        h0_b = h0_old.astype(jnp.float32)[None, :]
        lg_b = jnp.pad(logits_old.astype(jnp.float32), (0, a_p - n_act))[None, :]

        out = call(obs_b, h0_b, lg_b, packed["w_cat"], packed["b_cat"],
                   packed["w1_h"], packed["wc2"], packed["bc2"])

        action_prob = out[0, :n_act]
        value = out[0, a_p:a_p + 1]
        h0_new = out[0, a_p + H:a_p + 2 * H]
        logits_new = out[0, a_p + 2 * H:a_p + 2 * H + n_act]
        return action_prob, value, [h0_new, logits_new]

    return forward


# --------------------------------------------------------------------------- #
# Demo / self-check
# --------------------------------------------------------------------------- #
if __name__ == "__main__":
    obs_dim, n_act = 8, 6

    key = jax.random.PRNGKey(0)
    ks = jax.random.split(key, 9)
    s = 0.1
    params = {
        "w0": jax.random.normal(ks[0], (H, obs_dim), jnp.float32) * s,
        "b0": jax.random.normal(ks[1], (H,), jnp.float32) * s,
        "w1": jax.random.normal(ks[2], (n_act, obs_dim + H), jnp.float32) * s,
        "b1": jax.random.normal(ks[3], (n_act,), jnp.float32) * s,
        "wc1": jax.random.normal(ks[4], (H, obs_dim), jnp.float32) * s,
        "bc1": jax.random.normal(ks[5], (H,), jnp.float32) * s,
        "wc2": jax.random.normal(ks[6], (1, H), jnp.float32) * s,
        "bc2": jax.random.normal(ks[7], (1,), jnp.float32) * s,
    }
    obs = jax.random.normal(ks[8], (obs_dim,), jnp.float32)

    # ---- plain-JAX reference mirroring the PyTorch module -------------------
    def leaky(x):
        return jnp.where(x >= 0, x, 0.01 * x)

    def ref_init_hidden(o):
        h0 = leaky(o @ params["w0"].T + params["b0"])
        lg = jnp.concatenate([o, h0]) @ params["w1"].T + params["b1"]
        return [h0, lg]

    def ref_forward(o, hidden):
        h0_old, lg_old = hidden
        h0_new = leaky(o @ params["w0"].T + params["b0"])
        lg_new = jnp.concatenate([o, h0_old]) @ params["w1"].T + params["b1"]
        prob = jax.nn.softmax(lg_old)
        val = leaky(o @ params["wc1"].T + params["bc1"]) @ params["wc2"].T + params["bc2"]
        return prob, val, [h0_new, lg_new]

    hidden0 = ref_init_hidden(obs)

    forward = make_forward(params, obs_dim, n_act)
    prob, value, new_hidden = forward(obs, hidden0[0], hidden0[1])
    jax.block_until_ready((prob, value, new_hidden))

    prob_r, value_r, new_hidden_r = ref_forward(obs, hidden0)
    np.testing.assert_allclose(np.asarray(prob), np.asarray(prob_r), rtol=2e-2, atol=5e-3)
    np.testing.assert_allclose(np.asarray(value), np.asarray(value_r), rtol=2e-2, atol=5e-3)
    np.testing.assert_allclose(np.asarray(new_hidden[0]), np.asarray(new_hidden_r[0]),
                               rtol=2e-2, atol=5e-3)
    np.testing.assert_allclose(np.asarray(new_hidden[1]), np.asarray(new_hidden_r[1]),
                               rtol=2e-2, atol=5e-3)

    print("KERNEL_OK")
</pallas_src>

<mosaic_0001>
module attributes {stable_mosaic.version = 11 : i64} {
  func.func @_policy_kernel(%arg0: memref<1x16xf32, #tpu.memory_space<vmem>>, %arg1: memref<1x128xf32, #tpu.memory_space<vmem>>, %arg2: memref<1x128xf32, #tpu.memory_space<vmem>>, %arg3: memref<16x384xbf16, #tpu.memory_space<vmem>>, %arg4: memref<1x384xf32, #tpu.memory_space<vmem>>, %arg5: memref<128x128xbf16, #tpu.memory_space<vmem>>, %arg6: memref<1x128xf32, #tpu.memory_space<vmem>>, %arg7: memref<1x1xf32, #tpu.memory_space<vmem>>, %arg8: memref<1x512xf32, #tpu.memory_space<vmem>>) attributes {dimension_semantics = [], scalar_prefetch = 0 : i64, scratch_operands = 0 : i64, tpu.core_type = #tpu.core_type<tc>} {
    %c0 = arith.constant 0 : index
    %c0_0 = arith.constant 0 : index
    %0 = vector.load %arg0[%c0, %c0_0] : memref<1x16xf32, #tpu.memory_space<vmem>>, vector<1x16xf32>
    %1 = arith.truncf %0 : vector<1x16xf32> to vector<1x16xbf16>
    %c0_1 = arith.constant 0 : index
    %c0_2 = arith.constant 0 : index
    %2 = vector.load %arg3[%c0_1, %c0_2] : memref<16x384xbf16, #tpu.memory_space<vmem>>, vector<16x384xbf16>
    %cst = arith.constant dense<0.000000e+00> : vector<1x384xf32>
    %3 = tpu.matmul %1, %2, %cst {dimension_numbers = #tpu.dot_dimension_numbers<[1], [0], [0], [1], [0, 0, 1, 1], [], []>} : vector<1x16xbf16>, vector<16x384xbf16>, vector<1x384xf32> -> vector<1x384xf32>
    %c0_3 = arith.constant 0 : index
    %c0_4 = arith.constant 0 : index
    %4 = vector.load %arg4[%c0_3, %c0_4] : memref<1x384xf32, #tpu.memory_space<vmem>>, vector<1x384xf32>
    %5 = arith.addf %3, %4 : vector<1x384xf32>
    %6 = vector.extract_strided_slice %5 {offsets = [0, 0], sizes = [1, 128], strides = [1, 1]} : vector<1x384xf32> to vector<1x128xf32>
    %7 = vector.extract_strided_slice %5 {offsets = [0, 128], sizes = [1, 128], strides = [1, 1]} : vector<1x384xf32> to vector<1x128xf32>
    %8 = vector.extract_strided_slice %5 {offsets = [0, 256], sizes = [1, 128], strides = [1, 1]} : vector<1x384xf32> to vector<1x128xf32>
    %cst_5 = arith.constant 0.000000e+00 : f32
    %9 = vector.broadcast %cst_5 : f32 to vector<1x128xf32>
    %10 = arith.cmpf oge, %6, %9 : vector<1x128xf32>
    %cst_6 = arith.constant 0.00999999977 : f32
    %11 = vector.broadcast %cst_6 : f32 to vector<1x128xf32>
    %12 = arith.mulf %11, %6 : vector<1x128xf32>
    %13 = arith.select %10, %6, %12 : vector<1x128xi1>, vector<1x128xf32>
    %cst_7 = arith.constant 0.000000e+00 : f32
    %14 = vector.broadcast %cst_7 : f32 to vector<1x128xf32>
    %15 = arith.cmpf oge, %8, %14 : vector<1x128xf32>
    %cst_8 = arith.constant 0.00999999977 : f32
    %16 = vector.broadcast %cst_8 : f32 to vector<1x128xf32>
    %17 = arith.mulf %16, %8 : vector<1x128xf32>
    %18 = arith.select %15, %8, %17 : vector<1x128xi1>, vector<1x128xf32>
    %c0_9 = arith.constant 0 : index
    %c0_10 = arith.constant 0 : index
    %19 = vector.load %arg1[%c0_9, %c0_10] : memref<1x128xf32, #tpu.memory_space<vmem>>, vector<1x128xf32>
    %20 = arith.truncf %19 : vector<1x128xf32> to vector<1x128xbf16>
    %c0_11 = arith.constant 0 : index
    %c0_12 = arith.constant 0 : index
    %21 = vector.load %arg5[%c0_11, %c0_12] : memref<128x128xbf16, #tpu.memory_space<vmem>>, vector<128x128xbf16>
    %cst_13 = arith.constant dense<0.000000e+00> : vector<1x128xf32>
    %22 = tpu.matmul %20, %21, %cst_13 {dimension_numbers = #tpu.dot_dimension_numbers<[1], [0], [0], [1], [0, 0, 1, 1], [], []>} : vector<1x128xbf16>, vector<128x128xbf16>, vector<1x128xf32> -> vector<1x128xf32>
    %23 = arith.addf %7, %22 : vector<1x128xf32>
    %c0_14 = arith.constant 0 : index
    %c0_15 = arith.constant 0 : index
    %24 = vector.load %arg6[%c0_14, %c0_15] : memref<1x128xf32, #tpu.memory_space<vmem>>, vector<1x128xf32>
    %25 = arith.mulf %18, %24 : vector<1x128xf32>
    %cst_16 = arith.constant dense<0.000000e+00> : vector<1xf32>
    %26 = vector.multi_reduction <add>, %25, %cst_16 [1] : vector<1x128xf32> to vector<1xf32>
    %27 = vector.shape_cast %26 : vector<1xf32> to vector<1x1xf32>
    %c0_17 = arith.constant 0 : index
    %c0_18 = arith.constant 0 : index
    %28 = vector.load %arg7[%c0_17, %c0_18] : memref<1x1xf32, #tpu.memory_space<vmem>>, vector<1x1xf32>
    %29 = arith.addf %27, %28 : vector<1x1xf32>
    %c0_19 = arith.constant 0 : index
    %c0_20 = arith.constant 0 : index
    %30 = vector.load %arg2[%c0_19, %c0_20] : memref<1x128xf32, #tpu.memory_space<vmem>>, vector<1x128xf32>
    %31 = tpu.iota {dimensions = array<i32: 1>} : vector<1x128xi32>
    %c6_i32 = arith.constant 6 : i32
    %32 = vector.broadcast %c6_i32 : i32 to vector<1x128xi32>
    %33 = arith.cmpi slt, %31, %32 : vector<1x128xi32>
    %cst_21 = arith.constant -1.000000e+30 : f32
    %34 = vector.broadcast %cst_21 : f32 to vector<1x128xf32>
    %35 = arith.select %33, %30, %34 : vector<1x128xi1>, vector<1x128xf32>
    %cst_22 = arith.constant dense<0xFF800000> : vector<1xf32>
    %36 = vector.multi_reduction <maximumf>, %35, %cst_22 [1] : vector<1x128xf32> to vector<1xf32>
    %37 = vector.shape_cast %36 : vector<1xf32> to vector<1x1xf32>
    %38 = vector.broadcast %37 : vector<1x1xf32> to vector<1x128xf32>
    %39 = arith.subf %35, %38 : vector<1x128xf32>
    %40 = math.exp %39 : vector<1x128xf32>
    %cst_23 = arith.constant 0.000000e+00 : f32
    %41 = vector.broadcast %cst_23 : f32 to vector<1x128xf32>
    %42 = arith.select %33, %40, %41 : vector<1x128xi1>, vector<1x128xf32>
    %cst_24 = arith.constant dense<0.000000e+00> : vector<1xf32>
    %43 = vector.multi_reduction <add>, %42, %cst_24 [1] : vector<1x128xf32> to vector<1xf32>
    %44 = vector.shape_cast %43 : vector<1xf32> to vector<1x1xf32>
    %45 = vector.broadcast %44 : vector<1x1xf32> to vector<1x128xf32>
    %46 = arith.divf %42, %45 : vector<1x128xf32>
    %c0_25 = arith.constant 0 : index
    %c0_26 = arith.constant 0 : index
    %47 = vector.load %arg8[%c0_25, %c0_26] : memref<1x512xf32, #tpu.memory_space<vmem>>, vector<1x128xf32>
    tpu.vector_store %arg8[%c0_25, %c0_26], %46 {strides = array<i32>} : memref<1x512xf32, #tpu.memory_space<vmem>>, vector<1x128xf32>,
    %48 = vector.shape_cast %29 : vector<1x1xf32> to vector<1x1xf32>
    %49 = vector.broadcast %48 : vector<1x1xf32> to vector<1x128xf32>
    %c0_27 = arith.constant 0 : index
    %c128 = arith.constant 128 : index
    %50 = vector.load %arg8[%c0_27, %c128] : memref<1x512xf32, #tpu.memory_space<vmem>>, vector<1x128xf32>
    tpu.vector_store %arg8[%c0_27, %c128], %49 {strides = array<i32>} : memref<1x512xf32, #tpu.memory_space<vmem>>, vector<1x128xf32>,
    %c0_28 = arith.constant 0 : index
    %c256 = arith.constant 256 : index
    %51 = vector.load %arg8[%c0_28, %c256] : memref<1x512xf32, #tpu.memory_space<vmem>>, vector<1x128xf32>
    tpu.vector_store %arg8[%c0_28, %c256], %13 {strides = array<i32>} : memref<1x512xf32, #tpu.memory_space<vmem>>, vector<1x128xf32>,
    %c0_29 = arith.constant 0 : index
    %c384 = arith.constant 384 : index
    %52 = vector.load %arg8[%c0_29, %c384] : memref<1x512xf32, #tpu.memory_space<vmem>>, vector<1x128xf32>
    tpu.vector_store %arg8[%c0_29, %c384], %23 {strides = array<i32>} : memref<1x512xf32, #tpu.memory_space<vmem>>, vector<1x128xf32>,
    return
  }
}

</mosaic_0001>

<llo_original>
// kernel: forward.1
$region0: #{forward.1}
  #allocation0 [shape = 'u32[]', space=smem, size = 0x4, offset = 0x4, fixed_abs, tag = 'smem constant byte address 0x4 - core index']
  #allocation1 [shape = 'u32[72,128]{1,0:T(1,128)}', space=vmem, size = 0x9000, scoped, tag = 'internal scratch']
  #allocation2 [shape = 'f32[1,1]{1,0:T(1,128)S(1)}', space=vmem, size = 0x200, scoped, tag = 'scoped memory for forward.1']
  %s0 = inlined_call_operand.vmem [shape: f32[1,16], index: 0, kind: input, shape index: {}]
  %s1 = inlined_call_operand.hbm [shape: f32[1,128], index: 1, kind: input, shape index: {}]
  %s2 = inlined_call_operand.vmem [shape: f32[1,128], index: 2, kind: input, shape index: {}]
  %s3 = inlined_call_operand.hbm [shape: bf16[16,384], index: 3, kind: input, shape index: {}]
  %s4 = inlined_call_operand.vmem [shape: f32[1,384], index: 4, kind: input, shape index: {}]
  %s5 = inlined_call_operand.hbm [shape: bf16[128,128], index: 5, kind: input, shape index: {}]
  %s6 = inlined_call_operand.vmem [shape: f32[1,128], index: 6, kind: input, shape index: {}]
  %s7 = inlined_call_operand.<no memory space> [shape: f32[1,1], index: 7, kind: input, shape index: {}]
  %s8 = inlined_call_operand.vmem [shape: f32[1,512], index: 8, kind: output, shape index: {}]
  %s9 = sld [smem:[#allocation0]]
  $region54: #{forward.1} parent=0
    _
  %s11 = ssub.s32 1, %s9
  %s12 = scalar_select 0, %s11, %s9
  %v13 = vstv %s7
  %14 = vst [vmem:[#allocation2] sm:$0x1] %v13
  $region1: #{forward.1} parent=0
    #allocation3 [shape = 'u8[512]{0}', space=vmem, size = 0x400, scoped, tag = 'input window, operand 1, single buffered']
    #allocation4 [shape = 's32[1]{0}', space=sflag, size = 0x4, scoped, tag = 'scoped memory for forward.1']
    #allocation5 [shape = 'u8[12288]{0}', space=vmem, size = 0x3000, scoped, tag = 'input window, operand 3, single buffered']
    #allocation6 [shape = 's32[1]{0}', space=sflag, size = 0x4, scoped, tag = 'scoped memory for forward.1']
    #allocation7 [shape = 'u8[32768]{0}', space=vmem, size = 0x8000, scoped, tag = 'input window, operand 5, single buffered']
    %15 = vsyncpa [#allocation4], 0
    %16 = vsyncpa [#allocation6], 0
    // Predicated region
    $region2: #{forward.1} parent=1 // pred_check
      _
    $region3: #{forward.1} parent=1 // pred_check_branch
      %18 = sbr.rel (0) target = $region5
    $region4: #{forward.1} parent=1 // pred_region
      _
    $region5: #{forward.1} parent=1 // pred_fallthru
      _
    // Predicated region
    $region6: #{forward.1} parent=1 // pred_check
      _
    $region7: #{forward.1} parent=1 // pred_check_branch
      %20 = sbr.rel (0) target = $region9
    $region8: #{forward.1} parent=1 // pred_region
      %22 = vsyncadd [#allocation4], 0
      %s24 = sshll.u32 %s1, 4
      %s25 = int_to_ptr.hbm [resolvable:$true] %s24
      %s26 = sshll.u32 [#allocation3], 4
      %s27 = int_to_ptr.vmem [resolvable:$true] %s26
      %29 = dma.hbm_to_vmem [thread:$0]  %s25, 16, %s27, [#allocation4]
    $region9: #{forward.1} parent=1 // pred_fallthru
      _
    // Predicated region
    $region10: #{forward.1} parent=1 // pred_check
      _
    $region11: #{forward.1} parent=1 // pred_check_branch
      %31 = sbr.rel (0) target = $region13
    $region12: #{forward.1} parent=1 // pred_region
      _
    $region13: #{forward.1} parent=1 // pred_fallthru
      _
    // Predicated region
    $region14: #{forward.1} parent=1 // pred_check
      _
    $region15: #{forward.1} parent=1 // pred_check_branch
      %33 = sbr.rel (0) target = $region17
    $region16: #{forward.1} parent=1 // pred_region
      %35 = vsyncadd [#allocation6], 0
      %s36 = sshll.u32 %s3, 4
      %s37 = int_to_ptr.hbm [resolvable:$true] %s36
      %s38 = sshll.u32 [#allocation5], 4
      %s39 = int_to_ptr.vmem [resolvable:$true] %s38
      %44 = dma.hbm_to_vmem [thread:$0]  %s37, 384, %s39, [#allocation6], 192, 192, 12
    $region17: #{forward.1} parent=1 // pred_fallthru
      _
    // Predicated region
    $region18: #{forward.1} parent=1 // pred_check
      _
    $region19: #{forward.1} parent=1 // pred_check_branch
      %46 = sbr.rel (0) target = $region21
    $region20: #{forward.1} parent=1 // pred_region
      _
    $region21: #{forward.1} parent=1 // pred_fallthru
      _
    // Predicated region
    $region22: #{forward.1} parent=1 // pred_check
      _
    $region23: #{forward.1} parent=1 // pred_check_branch
      %48 = sbr.rel (0) target = $region25
    $region24: #{forward.1} parent=1 // pred_region
      %50 = vsyncadd [#allocation6], 0
      %s51 = sshll.u32 %s5, 4
      %s52 = int_to_ptr.hbm [resolvable:$true] %s51
      %s53 = sshll.u32 [#allocation7], 4
      %s54 = int_to_ptr.vmem [resolvable:$true] %s53
      %59 = dma.hbm_to_vmem [thread:$0]  %s52, 1024, %s54, [#allocation6], 64, 64, 4
    $region25: #{forward.1} parent=1 // pred_fallthru
      _
    // Predicated region
    $region26: #{forward.1} parent=1 // pred_check
      _
    $region27: #{forward.1} parent=1 // pred_check_branch
      %61 = sbr.rel (0) target = $region29
    $region28: #{forward.1} parent=1 // pred_region
      _
    $region29: #{forward.1} parent=1 // pred_fallthru
      _
    // Predicated region
    $region30: #{forward.1} parent=1 // pred_check
      _
    $region31: #{forward.1} parent=1 // pred_check_branch
      %63 = sbr.rel (0) target = $region33
    $region32: #{forward.1} parent=1 // pred_region
      _
    $region33: #{forward.1} parent=1 // pred_fallthru
      _
    // Predicated region
    $region34: #{forward.1} parent=1 // pred_check
      _
    $region35: #{forward.1} parent=1 // pred_check_branch
      %65 = sbr.rel (0) target = $region37
    $region36: #{forward.1} parent=1 // pred_region
      %67 = dma.done [#allocation4], 16
    $region37: #{forward.1} parent=1 // pred_fallthru
      _
    // Predicated region
    $region38: #{forward.1} parent=1 // pred_check
      _
    $region39: #{forward.1} parent=1 // pred_check_branch
      %69 = sbr.rel (0) target = $region41
    $region40: #{forward.1} parent=1 // pred_region
      %71 = dma.done [#allocation6], 384
    $region41: #{forward.1} parent=1 // pred_fallthru
      _
    // Predicated region
    $region42: #{forward.1} parent=1 // pred_check
      _
    $region43: #{forward.1} parent=1 // pred_check_branch
      %73 = sbr.rel (0) target = $region45
    $region44: #{forward.1} parent=1 // pred_region
      %75 = dma.done [#allocation6], 1024
    $region45: #{forward.1} parent=1 // pred_fallthru
      _
    %v77 = vld [vmem:[%s0] sm:$0x1]
    %v78 = vpack.c.bf16 %v77, %v77
    %v79 = vld [vmem:[#allocation5] sm:$0xff]
    %v80 = vld [vmem:[#allocation5 + $0x8] sm:$0xf]
    %v81 = vld [vmem:[#allocation5 + $0xc] sm:$0xff]
    %v82 = vld [vmem:[#allocation5 + $0x14] sm:$0xf]
    %v83 = vld [vmem:[%s4] sm:$0x7]
    %v88 = vunpack.c.l.b16 %v79
    %v89 = vunpack.c.h.b16 %v79
    %v90 = vunpack.c.l.b16 %v80
    %v91 = vunpack.c.l.b16 %v81
    %v92 = vunpack.c.h.b16 %v81
    %v93 = vunpack.c.l.b16 %v82
    %v94 = vpack.c.b16 %v91, %v88
    %v95 = vpack.c.b16 %v92, %v89
    %v96 = vpack.c.b16 %v93, %v90
    %v101 = vperm.slane %v83, 0
    %v102 = vperm.slane %v83, 1
    %v103 = vperm.slane %v83, 2
    %vm107 = vcmask 130048
    %v109 = vsel %vm107, %v78, 0
    %111 = vmatpush.bf16.msra.mxu0 0
    %112 = vmatpush.bf16.msra.mxu0 0
    %113 = vmatpush.bf16.msra.mxu0 0
    %114 = vmatpush.bf16.msra.mxu0 0
    %115 = vmatpush.bf16.msra.mxu0 0
    %116 = vmatpush.bf16.msra.mxu0 0
    %117 = vmatpush.bf16.msra.mxu0 0
    %118 = vmatpush.bf16.msra.mxu0 %v94
    %119 = vmatmul.bf16.gmra.mxu0 %v109
    %v120 = vpop.f32.mrf.mxu0
    %v121 = vadd.f32 %v101, %v120
    %v122 = vpop.f32.mrf.mxu0
    %123 = vdwg.mxu0
    %124 = vmatpush.bf16.msra.mxu0 0
    %125 = vmatpush.bf16.msra.mxu0 0
    %126 = vmatpush.bf16.msra.mxu0 0
    %127 = vmatpush.bf16.msra.mxu0 0
    %128 = vmatpush.bf16.msra.mxu0 0
    %129 = vmatpush.bf16.msra.mxu0 0
    %130 = vmatpush.bf16.msra.mxu0 0
    %131 = vmatpush.bf16.msra.mxu0 %v95
    %132 = vmatmul.bf16.gmra.mxu0 %v109
    %v133 = vpop.f32.mrf.mxu0
    %v134 = vadd.f32 %v102, %v133
    %v135 = vpop.f32.mrf.mxu0
    %136 = vdwg.mxu0
    %137 = vmatpush.bf16.msra.mxu0 0
    %138 = vmatpush.bf16.msra.mxu0 0
    %139 = vmatpush.bf16.msra.mxu0 0
    %140 = vmatpush.bf16.msra.mxu0 0
    %141 = vmatpush.bf16.msra.mxu0 0
    %142 = vmatpush.bf16.msra.mxu0 0
    %143 = vmatpush.bf16.msra.mxu0 0
    %144 = vmatpush.bf16.msra.mxu0 %v96
    %145 = vmatmul.bf16.gmra.mxu0 %v109
    %v146 = vpop.f32.mrf.mxu0
    %v147 = vadd.f32 %v103, %v146
    %v148 = vpop.f32.mrf.mxu0
    %149 = vdwg.mxu0
    %vm150 = vcmp.ge.f32.partialorder %v121, 0.0
    %v151 = vmul.f32 %v121, 0.01
    %v152 = vsel %vm150, %v121, %v151
    %vm153 = vcmp.ge.f32.partialorder %v147, 0.0
    %v154 = vmul.f32 %v147, 0.01
    %v155 = vsel %vm153, %v147, %v154
    %v156 = vld [vmem:[#allocation3] sm:$0x1]
    %v157 = vpack.c.bf16 %v156, %v156
    %v158 = vld [vmem:[#allocation7] sm:$0xf]
    %v159 = vld [vmem:[#allocation7 + $0x4] sm:$0xf]
    %v160 = vld [vmem:[#allocation7 + $0x8] sm:$0xf]
    %v161 = vld [vmem:[#allocation7 + $0xc] sm:$0xf]
    %v162 = vld [vmem:[#allocation7 + $0x10] sm:$0xf]
    %v163 = vld [vmem:[#allocation7 + $0x14] sm:$0xf]
    %v164 = vld [vmem:[#allocation7 + $0x18] sm:$0xf]
    %v165 = vld [vmem:[#allocation7 + $0x1c] sm:$0xf]
    %v166 = vld [vmem:[#allocation7 + $0x20] sm:$0xf]
    %v167 = vld [vmem:[#allocation7 + $0x24] sm:$0xf]
    %v168 = vld [vmem:[#allocation7 + $0x28] sm:$0xf]
    %v169 = vld [vmem:[#allocation7 + $0x2c] sm:$0xf]
    %v170 = vld [vmem:[#allocation7 + $0x30] sm:$0xf]
    %v171 = vld [vmem:[#allocation7 + $0x34] sm:$0xf]
    %v172 = vld [vmem:[#allocation7 + $0x38] sm:$0xf]
    %v173 = vld [vmem:[#allocation7 + $0x3c] sm:$0xf]
    %v190 = vunpack.c.l.b16 %v158
    %v191 = vunpack.c.l.b16 %v159
    %v192 = vunpack.c.l.b16 %v160
    %v193 = vunpack.c.l.b16 %v161
    %v194 = vunpack.c.l.b16 %v162
    %v195 = vunpack.c.l.b16 %v163
    %v196 = vunpack.c.l.b16 %v164
    %v197 = vunpack.c.l.b16 %v165
    %v198 = vunpack.c.l.b16 %v166
    %v199 = vunpack.c.l.b16 %v167
    %v200 = vunpack.c.l.b16 %v168
    %v201 = vunpack.c.l.b16 %v169
    %v202 = vunpack.c.l.b16 %v170
    %v203 = vunpack.c.l.b16 %v171
    %v204 = vunpack.c.l.b16 %v172
    %v205 = vunpack.c.l.b16 %v173
    %v206 = vpack.c.b16 %v191, %v190
    %v207 = vpack.c.b16 %v193, %v192
    %v208 = vpack.c.b16 %v195, %v194
    %v209 = vpack.c.b16 %v197, %v196
    %v210 = vpack.c.b16 %v199, %v198
    %v211 = vpack.c.b16 %v201, %v200
    %v212 = vpack.c.b16 %v203, %v202
    %v213 = vpack.c.b16 %v205, %v204
    %222 = vmatpush.bf16.msra.mxu0 %v213
    %223 = vmatpush.bf16.msra.mxu0 %v212
    %224 = vmatpush.bf16.msra.mxu0 %v211
    %225 = vmatpush.bf16.msra.mxu0 %v210
    %226 = vmatpush.bf16.msra.mxu0 %v209
    %227 = vmatpush.bf16.msra.mxu0 %v208
    %228 = vmatpush.bf16.msra.mxu0 %v207
    %229 = vmatpush.bf16.msra.mxu0 %v206
    %230 = vmatmul.bf16.gmra.mxu0 %v157
    %v231 = vpop.f32.mrf.mxu0
    %v232 = vadd.f32 0.0, %v231
    %v233 = vpop.f32.mrf.mxu0
    %234 = vdwg.mxu0
    %v235 = vadd.f32 %v134, %v232
    %v236 = vld [vmem:[%s6] sm:$0x1]
    %v237 = vmul.f32 %v155, %v236
    %vm238 = vcmask 1040384
    %v239 = vsel %vm238, %v237, 0.0
    %240 = vadd.xlane.f32.xlu0 %v239
    %v241 = vpop.xlane.xlu0 %240
    %v242 = vld [vmem:[#allocation2] sm:$0x1]
    %v243 = vadd.f32 %v241, %v242
    %v244 = vld [vmem:[%s2] sm:$0x1]
    %v245 = vlaneseq
    %v246 = vand.u32 %v245, 127
    %vm247 = vcmp.lt.s32.totalorder %v246, 6
    %v248 = vsel %vm247, %v244, -1e+30
    %v249 = vsel %vm238, %v248, -inf
    %250 = vmax.xlane.f32.xlu0 %v249
    %v251 = vpop.xlane.xlu0 %250
    %v252 = vsub.f32 %v248, %v251
    %v253 = vmul.f32 %v252, 1.442695
    %v254 = vpow.pop %v253
    %v255 = vsel %vm247, %v254, 0.0
    %v256 = vsel %vm238, %v255, 0.0
    %257 = vadd.xlane.f32.xlu0 %v256
    %v258 = vpop.xlane.xlu0 %257
    %v259 = vrcp.pop %v258
    %v260 = vmul.f32 %v258, %v259
    %v261 = vsub.f32 1.0, %v260
    %v262 = vmul.f32 %v259, %v261
    %v263 = vadd.f32 %v259, %v262
    %vm264 = vweird.f32 %v258
    %vm265 = vweird.f32 %v259
    %vm266 = vmor %vm264, %vm265
    %v267 = vsel %vm266, %v259, %v263
    %v268 = vand.u32 2147483647, %v258
    %vm269 = vcmp.eq.f32.partialorder %v268, 8.507059e+37
    %v270 = vand.u32 %v258, 2147483648
    %v271 = vor.u32 1.1754944e-38, %v270
    %v272 = vsel %vm269, %v271, %v267
    %v273 = vmul.f32 %v255, %v272
    %v274 = vlaneseq
    %vm275 = vcmp.ge.s32.totalorder %v274, 0
    %vm276 = vcmp.lt.s32.totalorder %v274, 128
    %vm277 = vmand %vm275, %vm276
    %278 = vst.msk [vmem:[%s8] sm:$0x1] %vm277, %v273
    %280 = vset.pattern.permute.xlu0 0
    %281 = vperm.xlu0 %280, %v243
    %v282 = vpop.permute.xlu0 %281
    %284 = vst.msk [vmem:[%s8 + $0x1] sm:$0x1] %vm277, %v282
    %285 = vst.msk [vmem:[%s8 + $0x2] sm:$0x1] %vm277, %v152
    %286 = vst.msk [vmem:[%s8 + $0x3] sm:$0x1] %vm277, %v235
    // Predicated region
    $region46: #{forward.1} parent=1 // pred_check
      _
    $region47: #{forward.1} parent=1 // pred_check_branch
      %288 = sbr.rel (0) target = $region49
    $region48: #{forward.1} parent=1 // pred_region
      _
    $region49: #{forward.1} parent=1 // pred_fallthru
      _
    // Predicated region
    $region50: #{forward.1} parent=1 // pred_check
      _
    $region51: #{forward.1} parent=1 // pred_check_branch
      %290 = sbr.rel (0) target = $region53
    $region52: #{forward.1} parent=1 // pred_region
      _
    $region53: #{forward.1} parent=1 // pred_fallthru
      _
    %291 = vsyncpa [#allocation4], 1
    %292 = vsyncpa [#allocation6], 1

</llo_original>
